<compile_context>
chip_gen: v7x
topology: tpu7x:2x2x1
jax: 0.10.0
libtpu: 0.0.40
codegen_flags: <defaults>
</compile_context>

<pallas_src>
import functools

import jax
import jax.numpy as jnp
import numpy as np
from jax.experimental import pallas as pl
from jax.experimental.pallas import tpu as pltpu

LANE = 128


# ------------------------------ fused Pallas kernel -------------------------


def _mpsage_fused_kernel(a0_ref, a1_ref, a2_ref, x_ref, w_ref, b_ref, o_ref,
                         *, n1, n2, n3, H, f_in):
    """One batch element per grid step: 3 SAGE layers fully resident in VMEM/vregs."""
    bf16 = jnp.bfloat16
    dot = lambda a, b: jnp.dot(a, b, preferred_element_type=jnp.float32)

    a0 = a0_ref[0]                      # [n1, n0] bf16 mean-aggregation matrix
    a1 = a1_ref[0]                      # [n2, n1]
    a2 = a2_ref[0]                      # [n3, n2]
    x = x_ref[0]                        # [n0, f_in] bf16

    # Weight slab (bf16, 2*LANE lanes): per layer, W_neigh lives in lanes [0, H_out) and
    # W_self in lanes [LANE, LANE + H_out) so all result slices are vreg-aligned.
    w0 = w_ref[0:f_in, :]               # layer 0: [f_in, 2*LANE]
    w1 = w_ref[f_in:f_in + H, :]        # layer 1: [H, 2*LANE]
    w2 = w_ref[f_in + H:f_in + 2 * H, :]  # layer 2: [H, 2*LANE]

    ddp_b = b_ref[0:1, 0:H]             # f32 biases (epilogue math kept in f32)
    b1 = b_ref[1:2, 0:H]
    b2 = b_ref[2:3, :]                  # [1, LANE] (lane-padded n_classes bias)

    # ---- layer 0: MPSAGEConv(f_in -> H, 'mean', bias=False) + feature-shuffle(identity)
    #      + MPDDP pre-step (h + bias; relu; dropout no-op) fused as epilogue ----
    p0 = dot(x, w0)                                         # [n0, 2*LANE] f32 (neigh|self)
    neigh0 = dot(a0, p0[:, 0:H].astype(bf16))               # [n1, H] f32
    h1 = jnp.maximum(neigh0 + p0[:n1, LANE:LANE + H] + ddp_b, 0.0)
    h1b = h1.astype(bf16)

    # ---- layer 1: SAGEConv(H -> H, 'mean') + relu ----
    p1 = dot(h1b, w1)                                       # [n1, 2*LANE]
    neigh1 = dot(a1, p1[:, 0:H].astype(bf16))               # [n2, H]
    h2 = jnp.maximum(neigh1 + p1[:n2, LANE:LANE + H] + b1, 0.0)
    h2b = h2.astype(bf16)

    # ---- layer 2: SAGEConv(H -> n_classes, 'mean'), no activation ----
    # Reassociated: A2 @ (H @ Wn2) + (H @ Ws2)[:n3]; one merged projection, one aggregation.
    q = dot(h2b, w2)                                        # [n2, 2*LANE]
    out = dot(a2, q[:, 0:LANE].astype(bf16)) + q[:n3, LANE:] + b2   # [n3, LANE] f32
    o_ref[0] = out.astype(o_ref.dtype)                      # lane-dense store


# --------------------------- hoisted parameter packing ----------------------


def prepare_params(params):
    """One-time packing of all weights/biases into two slabs (hoisted out of the forward)."""
    f_in, H = params["mp_w_neigh"].shape

    def wcat(wn, ws):
        # [K, 2*LANE] f32: neigh weights in lanes [0, out), self weights in [LANE, LANE+out).
        k, out = wn.shape
        blk = jnp.zeros((k, 2 * LANE), jnp.float32)
        blk = blk.at[:, :out].set(wn)
        blk = blk.at[:, LANE:LANE + out].set(ws)
        return blk

    w_slab = jnp.concatenate([
        wcat(params["mp_w_neigh"], params["mp_w_self"]),    # rows [0, f_in)
        wcat(params["l1_w_neigh"], params["l1_w_self"]),    # rows [f_in, f_in+H)
        wcat(params["l2_w_neigh"], params["l2_w_self"]),    # rows [f_in+H, f_in+2H)
    ], axis=0).astype(jnp.bfloat16)                         # [f_in + 2H, 2*LANE] bf16

    def bpad(v):
        return jnp.pad(v.astype(jnp.float32), (0, LANE - v.shape[0]))

    b_slab = jnp.stack([bpad(params["ddp_bias"]),
                        bpad(params["l1_bias"]),
                        bpad(params["l2_bias"])], axis=0)   # [3, LANE] f32
    return w_slab, b_slab


# ------------------------------- batched forward -----------------------------


@functools.partial(jax.jit, static_argnames=("n_classes",))
def mpsage_forward(w_slab, b_slab, a0, a1, a2, x, *, n_classes):
    """MPSAGE.forward for a batch of B sampled subgraphs (world_size == 1)."""
    B, n1, n0 = a0.shape
    n2, n3 = a1.shape[1], a2.shape[1]
    f_in = x.shape[2]
    H = (w_slab.shape[0] - f_in) // 2

    kernel = functools.partial(_mpsage_fused_kernel, n1=n1, n2=n2, n3=n3, H=H, f_in=f_in)

    flops = 2 * B * (n0 * f_in * 2 * LANE      # p0
                     + n1 * n0 * H             # neigh0
                     + n1 * H * 2 * LANE       # p1
                     + n2 * n1 * H             # neigh1
                     + n2 * H * 2 * LANE       # q
                     + n3 * n2 * LANE)         # final aggregation
    bytes_accessed = (2 * (a0.size + a1.size + a2.size + x.size + w_slab.size)
                      + 4 * (b_slab.size + B * n3 * LANE))

    out_pad = pl.pallas_call(
        kernel,
        out_shape=jax.ShapeDtypeStruct((B, n3, LANE), jnp.float32),
        grid=(B,),
        in_specs=[
            pl.BlockSpec((1, n1, n0), lambda b: (b, 0, 0)),
            pl.BlockSpec((1, n2, n1), lambda b: (b, 0, 0)),
            pl.BlockSpec((1, n3, n2), lambda b: (b, 0, 0)),
            pl.BlockSpec((1, n0, f_in), lambda b: (b, 0, 0)),
            pl.BlockSpec(w_slab.shape, lambda b: (0, 0)),   # resident: fetched once
            pl.BlockSpec(b_slab.shape, lambda b: (0, 0)),   # resident: fetched once
        ],
        out_specs=pl.BlockSpec((1, n3, LANE), lambda b: (b, 0, 0)),
        compiler_params=pltpu.CompilerParams(dimension_semantics=("parallel",)),
        cost_estimate=pl.CostEstimate(flops=flops, transcendentals=0,
                                      bytes_accessed=bytes_accessed),
    )(a0, a1, a2, x, w_slab, b_slab)
    return out_pad[:, :, :n_classes]


# -------------------------------- references ---------------------------------


def mpsage_reference_f32(params, blocks, x):
    """Pure-f32 JAX reference (module semantics) for one subgraph."""
    def sage(A, H, wn, ws, b):
        n_dst = A.shape[0]
        out = (A @ H) @ wn + H[:n_dst] @ ws
        return out if b is None else out + b[None, :]

    h = sage(blocks[0], x, params["mp_w_neigh"], params["mp_w_self"], None)
    h = jnp.maximum(h + params["ddp_bias"][None, :], 0.0)
    h = jnp.maximum(
        sage(blocks[1], h, params["l1_w_neigh"], params["l1_w_self"], params["l1_bias"]), 0.0)
    return sage(blocks[2], h, params["l2_w_neigh"], params["l2_w_self"], params["l2_bias"])


def mpsage_reference_bf16(params, blocks, x):
    """Pure-JAX reference mirroring the kernel's bf16 / f32-accumulate math and association."""
    bf = jnp.bfloat16
    dot = lambda a, b: jnp.dot(a, b, preferred_element_type=jnp.float32)
    wb = lambda name: params[name].astype(bf)
    a0, a1, a2 = (b_.astype(bf) for b_ in blocks)
    n1, n2, n3 = (b_.shape[0] for b_ in blocks)
    xb = x.astype(bf)

    pn0 = dot(xb, wb("mp_w_neigh"))
    ps0 = dot(xb, wb("mp_w_self"))
    h1 = jnp.maximum(dot(a0, pn0.astype(bf)) + ps0[:n1] + params["ddp_bias"][None, :], 0.0)
    h1b = h1.astype(bf)

    pn1 = dot(h1b, wb("l1_w_neigh"))
    ps1 = dot(h1b, wb("l1_w_self"))
    h2 = jnp.maximum(dot(a1, pn1.astype(bf)) + ps1[:n2] + params["l1_bias"][None, :], 0.0)
    h2b = h2.astype(bf)

    qn = dot(h2b, wb("l2_w_neigh"))
    qs = dot(h2b, wb("l2_w_self"))
    return dot(a2, qn.astype(bf)) + qs[:n3] + params["l2_bias"][None, :]


# --------------------------- parameter / data construction -------------------


def xavier(key, shape):
    fan_in, fan_out = shape
    gain = float(np.sqrt(2.0))  # relu gain, as in DGL SAGEConv reset_parameters
    limit = gain * float(np.sqrt(6.0 / (fan_in + fan_out)))
    return jax.random.uniform(key, shape, jnp.float32, -limit, limit)


def make_block(key, n_dst, n_src, fanout):
    """Dense mean-aggregation matrix for a sampled bipartite block."""
    idx = jax.random.randint(key, (n_dst, fanout), 0, n_src)
    onehot = jax.nn.one_hot(idx, n_src, dtype=jnp.float32)  # [n_dst, fanout, n_src]
    return onehot.mean(axis=1)                               # [n_dst, n_src]


# ------------------------------------ main ------------------------------------


if __name__ == "__main__":
    # Small synthetic config (world_size = 1, rank = 0), fan_out = [4, 4, 4]
    mp_in_feats = 64      # args.mp_input_dim_list[rank]
    n_hidden = 32
    n_classes = 8
    fanout = 4
    # node counts per sampled level (block[i]: n_src -> n_dst; dst = prefix of src)
    n0, n1, n2, n3 = 64, 32, 16, 8
    B = 4                 # batch of sampled subgraphs processed per kernel launch

    key = jax.random.PRNGKey(0)
    keys = jax.random.split(key, 13)

    params = {
        # MPSAGEConv(mp_in_feats, n_hidden, 'mean', bias=False)
        "mp_w_neigh": xavier(keys[0], (mp_in_feats, n_hidden)),
        "mp_w_self":  xavier(keys[1], (mp_in_feats, n_hidden)),
        # MPDDP.bias (zero-initialized in the module; random here to exercise the path)
        "ddp_bias":   0.1 * jax.random.normal(keys[10], (n_hidden,), jnp.float32),
        # SAGEConv(n_hidden, n_hidden, 'mean')
        "l1_w_neigh": xavier(keys[2], (n_hidden, n_hidden)),
        "l1_w_self":  xavier(keys[3], (n_hidden, n_hidden)),
        "l1_bias":    0.1 * jax.random.normal(keys[11], (n_hidden,), jnp.float32),
        # SAGEConv(n_hidden, n_classes, 'mean')
        "l2_w_neigh": xavier(keys[4], (n_hidden, n_classes)),
        "l2_w_self":  xavier(keys[5], (n_hidden, n_classes)),
        "l2_bias":    0.1 * jax.random.normal(keys[12], (n_classes,), jnp.float32),
    }

    # Batched sampled subgraphs: blocks [B, n_dst, n_src], features [B, n0, f_in].
    make_blocks = jax.vmap(make_block, in_axes=(0, None, None, None))
    a0s = make_blocks(jax.random.split(keys[6], B), n1, n0, fanout)   # 64 src -> 32 dst
    a1s = make_blocks(jax.random.split(keys[7], B), n2, n1, fanout)   # 32 src -> 16 dst
    a2s = make_blocks(jax.random.split(keys[8], B), n3, n2, fanout)   # 16 src ->  8 dst
    xs = jax.random.normal(keys[9], (B, n0, mp_in_feats), jnp.float32)

    # Hoisted one-time prep: pack weights/biases into 2 slabs, cast graph operands to bf16.
    w_slab, b_slab = prepare_params(params)
    a0_bf, a1_bf, a2_bf, x_bf = (t.astype(jnp.bfloat16) for t in (a0s, a1s, a2s, xs))

    out = jax.block_until_ready(
        mpsage_forward(w_slab, b_slab, a0_bf, a1_bf, a2_bf, x_bf, n_classes=n_classes))
    assert out.shape == (B, n3, n_classes)

    # exact-math check: kernel vs a pure-JAX reference with identical bf16 casts/association
    ref_bf16 = jax.vmap(lambda b0, b1, b2, xx:
                        mpsage_reference_bf16(params, (b0, b1, b2), xx))(a0s, a1s, a2s, xs)
    np.testing.assert_allclose(np.asarray(out), np.asarray(ref_bf16), rtol=1e-3, atol=1e-3)

    # numerical-adequacy check: bf16-MXU kernel vs the full-f32 module reference (relaxed)
    ref_f32 = jax.vmap(lambda b0, b1, b2, xx:
                       mpsage_reference_f32(params, (b0, b1, b2), xx))(a0s, a1s, a2s, xs)
    np.testing.assert_allclose(np.asarray(out), np.asarray(ref_f32), rtol=5e-2, atol=2e-1)

    print("KERNEL_OK")
</pallas_src>

<mosaic_0001>
module attributes {stable_mosaic.version = 11 : i64} {
  func.func @_mpsage_fused_kernel(%arg0: i32, %arg1: memref<1x32x64xbf16, #tpu.memory_space<vmem>>, %arg2: memref<1x16x32xbf16, #tpu.memory_space<vmem>>, %arg3: memref<1x8x16xbf16, #tpu.memory_space<vmem>>, %arg4: memref<1x64x64xbf16, #tpu.memory_space<vmem>>, %arg5: memref<128x256xbf16, #tpu.memory_space<vmem>>, %arg6: memref<3x128xf32, #tpu.memory_space<vmem>>, %arg7: memref<1x8x128xf32, #tpu.memory_space<vmem>>) attributes {dimension_semantics = [#tpu.dimension_semantics<parallel>], iteration_bounds = array<i64: 4>, scalar_prefetch = 0 : i64, scratch_operands = 0 : i64, tpu.core_type = #tpu.core_type<tc>, window_params = [{transform_indices = @transform_0, window_bounds = array<i64: 1, 32, 64>}, {transform_indices = @transform_1, window_bounds = array<i64: 1, 16, 32>}, {transform_indices = @transform_2, window_bounds = array<i64: 1, 8, 16>}, {transform_indices = @transform_3, window_bounds = array<i64: 1, 64, 64>}, {pipeline_mode = #tpu.pipeline_mode<synchronous>, transform_indices = @transform_4, window_bounds = array<i64: 128, 256>}, {pipeline_mode = #tpu.pipeline_mode<synchronous>, transform_indices = @transform_5, window_bounds = array<i64: 3, 128>}, {transform_indices = @transform_6, window_bounds = array<i64: 1, 8, 128>}]} {
    %c0 = arith.constant 0 : index
    %c0_0 = arith.constant 0 : index
    %c0_1 = arith.constant 0 : index
    %0 = vector.load %arg1[%c0, %c0_0, %c0_1] : memref<1x32x64xbf16, #tpu.memory_space<vmem>>, vector<1x32x64xbf16>
    %1 = vector.shape_cast %0 : vector<1x32x64xbf16> to vector<32x64xbf16>
    %c0_2 = arith.constant 0 : index
    %c0_3 = arith.constant 0 : index
    %c0_4 = arith.constant 0 : index
    %2 = vector.load %arg2[%c0_2, %c0_3, %c0_4] : memref<1x16x32xbf16, #tpu.memory_space<vmem>>, vector<1x16x32xbf16>
    %3 = vector.shape_cast %2 : vector<1x16x32xbf16> to vector<16x32xbf16>
    %c0_5 = arith.constant 0 : index
    %c0_6 = arith.constant 0 : index
    %c0_7 = arith.constant 0 : index
    %4 = vector.load %arg3[%c0_5, %c0_6, %c0_7] : memref<1x8x16xbf16, #tpu.memory_space<vmem>>, vector<1x8x16xbf16>
    %5 = vector.shape_cast %4 : vector<1x8x16xbf16> to vector<8x16xbf16>
    %c0_8 = arith.constant 0 : index
    %c0_9 = arith.constant 0 : index
    %c0_10 = arith.constant 0 : index
    %6 = vector.load %arg4[%c0_8, %c0_9, %c0_10] : memref<1x64x64xbf16, #tpu.memory_space<vmem>>, vector<1x64x64xbf16>
    %7 = vector.shape_cast %6 : vector<1x64x64xbf16> to vector<64x64xbf16>
    %c0_11 = arith.constant 0 : index
    %c0_12 = arith.constant 0 : index
    %8 = vector.load %arg5[%c0_11, %c0_12] : memref<128x256xbf16, #tpu.memory_space<vmem>>, vector<64x256xbf16>
    %c64 = arith.constant 64 : index
    %c0_13 = arith.constant 0 : index
    %9 = vector.load %arg5[%c64, %c0_13] : memref<128x256xbf16, #tpu.memory_space<vmem>>, vector<32x256xbf16>
    %c96 = arith.constant 96 : index
    %c0_14 = arith.constant 0 : index
    %10 = vector.load %arg5[%c96, %c0_14] : memref<128x256xbf16, #tpu.memory_space<vmem>>, vector<32x256xbf16>
    %c0_15 = arith.constant 0 : index
    %c0_16 = arith.constant 0 : index
    %11 = vector.load %arg6[%c0_15, %c0_16] : memref<3x128xf32, #tpu.memory_space<vmem>>, vector<1x32xf32>
    %c1 = arith.constant 1 : index
    %c0_17 = arith.constant 0 : index
    %12 = vector.load %arg6[%c1, %c0_17] : memref<3x128xf32, #tpu.memory_space<vmem>>, vector<1x32xf32>
    %c2 = arith.constant 2 : index
    %c0_18 = arith.constant 0 : index
    %13 = vector.load %arg6[%c2, %c0_18] : memref<3x128xf32, #tpu.memory_space<vmem>>, vector<1x128xf32>
    %cst = arith.constant dense<0.000000e+00> : vector<64x256xf32>
    %14 = tpu.matmul %7, %8, %cst {dimension_numbers = #tpu.dot_dimension_numbers<[1], [0], [0], [1], [0, 0, 1, 1], [], []>} : vector<64x64xbf16>, vector<64x256xbf16>, vector<64x256xf32> -> vector<64x256xf32>
    %15 = vector.extract_strided_slice %14 {offsets = [0, 0], sizes = [64, 32], strides = [1, 1]} : vector<64x256xf32> to vector<64x32xf32>
    %16 = arith.truncf %15 : vector<64x32xf32> to vector<64x32xbf16>
    %cst_19 = arith.constant dense<0.000000e+00> : vector<32x32xf32>
    %17 = tpu.matmul %1, %16, %cst_19 {dimension_numbers = #tpu.dot_dimension_numbers<[1], [0], [0], [1], [0, 0, 1, 1], [], []>} : vector<32x64xbf16>, vector<64x32xbf16>, vector<32x32xf32> -> vector<32x32xf32>
    %18 = vector.extract_strided_slice %14 {offsets = [0, 128], sizes = [32, 32], strides = [1, 1]} : vector<64x256xf32> to vector<32x32xf32>
    %19 = arith.addf %17, %18 : vector<32x32xf32>
    %20 = vector.broadcast %11 : vector<1x32xf32> to vector<32x32xf32>
    %21 = arith.addf %19, %20 : vector<32x32xf32>
    %cst_20 = arith.constant 0.000000e+00 : f32
    %22 = vector.broadcast %cst_20 : f32 to vector<32x32xf32>
    %23 = arith.maximumf %21, %22 : vector<32x32xf32>
    %24 = arith.truncf %23 : vector<32x32xf32> to vector<32x32xbf16>
    %cst_21 = arith.constant dense<0.000000e+00> : vector<32x256xf32>
    %25 = tpu.matmul %24, %9, %cst_21 {dimension_numbers = #tpu.dot_dimension_numbers<[1], [0], [0], [1], [0, 0, 1, 1], [], []>} : vector<32x32xbf16>, vector<32x256xbf16>, vector<32x256xf32> -> vector<32x256xf32>
    %26 = vector.extract_strided_slice %25 {offsets = [0, 0], sizes = [32, 32], strides = [1, 1]} : vector<32x256xf32> to vector<32x32xf32>
    %27 = arith.truncf %26 : vector<32x32xf32> to vector<32x32xbf16>
    %cst_22 = arith.constant dense<0.000000e+00> : vector<16x32xf32>
    %28 = tpu.matmul %3, %27, %cst_22 {dimension_numbers = #tpu.dot_dimension_numbers<[1], [0], [0], [1], [0, 0, 1, 1], [], []>} : vector<16x32xbf16>, vector<32x32xbf16>, vector<16x32xf32> -> vector<16x32xf32>
    %29 = vector.extract_strided_slice %25 {offsets = [0, 128], sizes = [16, 32], strides = [1, 1]} : vector<32x256xf32> to vector<16x32xf32>
    %30 = arith.addf %28, %29 : vector<16x32xf32>
    %31 = vector.broadcast %12 : vector<1x32xf32> to vector<16x32xf32>
    %32 = arith.addf %30, %31 : vector<16x32xf32>
    %cst_23 = arith.constant 0.000000e+00 : f32
    %33 = vector.broadcast %cst_23 : f32 to vector<16x32xf32>
    %34 = arith.maximumf %32, %33 : vector<16x32xf32>
    %35 = arith.truncf %34 : vector<16x32xf32> to vector<16x32xbf16>
    %cst_24 = arith.constant dense<0.000000e+00> : vector<16x256xf32>
    %36 = tpu.matmul %35, %10, %cst_24 {dimension_numbers = #tpu.dot_dimension_numbers<[1], [0], [0], [1], [0, 0, 1, 1], [], []>} : vector<16x32xbf16>, vector<32x256xbf16>, vector<16x256xf32> -> vector<16x256xf32>
    %37 = vector.extract_strided_slice %36 {offsets = [0, 0], sizes = [16, 128], strides = [1, 1]} : vector<16x256xf32> to vector<16x128xf32>
    %38 = arith.truncf %37 : vector<16x128xf32> to vector<16x128xbf16>
    %cst_25 = arith.constant dense<0.000000e+00> : vector<8x128xf32>
    %39 = tpu.matmul %5, %38, %cst_25 {dimension_numbers = #tpu.dot_dimension_numbers<[1], [0], [0], [1], [0, 0, 1, 1], [], []>} : vector<8x16xbf16>, vector<16x128xbf16>, vector<8x128xf32> -> vector<8x128xf32>
    %40 = vector.extract_strided_slice %36 {offsets = [0, 128], sizes = [8, 128], strides = [1, 1]} : vector<16x256xf32> to vector<8x128xf32>
    %41 = arith.addf %39, %40 : vector<8x128xf32>
    %42 = vector.broadcast %13 : vector<1x128xf32> to vector<8x128xf32>
    %43 = arith.addf %41, %42 : vector<8x128xf32>
    %c0_26 = arith.constant 0 : index
    %c0_27 = arith.constant 0 : index
    %c0_28 = arith.constant 0 : index
    %44 = vector.load %arg7[%c0_26, %c0_27, %c0_28] : memref<1x8x128xf32, #tpu.memory_space<vmem>>, vector<1x8x128xf32>
    %45 = vector.shape_cast %44 : vector<1x8x128xf32> to vector<8x128xf32>
    %46 = vector.shape_cast %43 : vector<8x128xf32> to vector<1x8x128xf32>
    tpu.vector_store %arg7[%c0_26, %c0_27, %c0_28], %46 {strides = array<i32>} : memref<1x8x128xf32, #tpu.memory_space<vmem>>, vector<1x8x128xf32>,
    return
  }
  func.func @transform_0(%arg0: i32) -> (i32, i32, i32) {
    %c0_i32 = arith.constant 0 : i32
    %c0_i32_0 = arith.constant 0 : i32
    %c0_i32_1 = arith.constant 0 : i32
    return %arg0, %c0_i32, %c0_i32_0 : i32, i32, i32
  }
  func.func @transform_1(%arg0: i32) -> (i32, i32, i32) {
    %c0_i32 = arith.constant 0 : i32
    %c0_i32_0 = arith.constant 0 : i32
    %c0_i32_1 = arith.constant 0 : i32
    return %arg0, %c0_i32, %c0_i32_0 : i32, i32, i32
  }
  func.func @transform_2(%arg0: i32) -> (i32, i32, i32) {
    %c0_i32 = arith.constant 0 : i32
    %c0_i32_0 = arith.constant 0 : i32
    %c0_i32_1 = arith.constant 0 : i32
    return %arg0, %c0_i32, %c0_i32_0 : i32, i32, i32
  }
  func.func @transform_3(%arg0: i32) -> (i32, i32, i32) {
    %c0_i32 = arith.constant 0 : i32
    %c0_i32_0 = arith.constant 0 : i32
    %c0_i32_1 = arith.constant 0 : i32
    return %arg0, %c0_i32, %c0_i32_0 : i32, i32, i32
  }
  func.func @transform_4(%arg0: i32) -> (i32, i32) {
    %c0_i32 = arith.constant 0 : i32
    %c0_i32_0 = arith.constant 0 : i32
    %c0_i32_1 = arith.constant 0 : i32
    return %c0_i32, %c0_i32_0 : i32, i32
  }
  func.func @transform_5(%arg0: i32) -> (i32, i32) {
    %c0_i32 = arith.constant 0 : i32
    %c0_i32_0 = arith.constant 0 : i32
    %c0_i32_1 = arith.constant 0 : i32
    return %c0_i32, %c0_i32_0 : i32, i32
  }
  func.func @transform_6(%arg0: i32) -> (i32, i32, i32) {
    %c0_i32 = arith.constant 0 : i32
    %c0_i32_0 = arith.constant 0 : i32
    %c0_i32_1 = arith.constant 0 : i32
    return %arg0, %c0_i32, %c0_i32_0 : i32, i32, i32
  }
}

</mosaic_0001>

<llo_original>
// kernel: mpsage_forward.1
$region0: #{mpsage_forward.1}
  #allocation0 [shape = 'u32[]', space=smem, size = 0x4, offset = 0x4, fixed_abs, tag = 'smem constant byte address 0x4 - core index']
  #allocation1 [shape = 'u32[144,128]{1,0:T(1,128)}', space=vmem, size = 0x12000, scoped, tag = 'internal scratch']
  %s0 = inlined_call_operand.hbm [shape: bf16[4,32,64], index: 0, kind: input, shape index: {}]
  %s1 = inlined_call_operand.hbm [shape: bf16[4,16,32], index: 1, kind: input, shape index: {}]
  %s2 = inlined_call_operand.hbm [shape: bf16[4,8,16], index: 2, kind: input, shape index: {}]
  %s3 = inlined_call_operand.hbm [shape: bf16[4,64,64], index: 3, kind: input, shape index: {}]
  %s4 = inlined_call_operand.hbm [shape: bf16[128,256], index: 4, kind: input, shape index: {}]
  %s5 = inlined_call_operand.hbm [shape: f32[3,128], index: 5, kind: input, shape index: {}]
  %s6 = inlined_call_operand.hbm [shape: f32[4,8,128], index: 6, kind: output, shape index: {}]
  %s7 = sld [smem:[#allocation0]]
  $region81: #{mpsage_forward.1} parent=0
    _
  %s9 = ssub.s32 1, %s7
  %s10 = scalar_select 0, %s9, %s7
  $region1: #{mpsage_forward.1} parent=0
    #allocation2 [shape = 'u8[16384]{0}', space=vmem, size = 0x4000, scoped, tag = 'input window, operand 0']
    #allocation3 [shape = 's32[2]{0}', space=sflag, size = 0x8, scoped, tag = 'scoped memory for mpsage_forward.1']
    #allocation4 [shape = 's32[2]{0}', space=sflag, size = 0x8, scoped, tag = 'scoped memory for mpsage_forward.1']
    #allocation5 [shape = 'u8[8192]{0}', space=vmem, size = 0x2000, scoped, tag = 'input window, operand 1']
    #allocation6 [shape = 's32[2]{0}', space=sflag, size = 0x8, scoped, tag = 'scoped memory for mpsage_forward.1']
    #allocation7 [shape = 'u8[4096]{0}', space=vmem, size = 0x1000, scoped, tag = 'input window, operand 2']
    #allocation8 [shape = 'u8[32768]{0}', space=vmem, size = 0x8000, scoped, tag = 'input window, operand 3']
    #allocation9 [shape = 's32[2]{0}', space=sflag, size = 0x8, scoped, tag = 'scoped memory for mpsage_forward.1']
    #allocation10 [shape = 'u8[65536]{0}', space=vmem, size = 0x10000, scoped, tag = 'input window, operand 4, single buffered']
    #allocation11 [shape = 'u8[2048]{0}', space=vmem, size = 0x800, scoped, tag = 'input window, operand 5, single buffered']
    #allocation12 [shape = 's32[1]{0}', space=sflag, size = 0x4, scoped, tag = 'scoped memory for mpsage_forward.1']
    #allocation13 [shape = 'u8[8192]{0}', space=vmem, size = 0x2000, scoped, tag = 'output window, operand 0']
    %11 = vsyncpa [#allocation3], 0
    %s12 = scalar_lea.sflag [#allocation3], 1
    %13 = vsyncpa %s12, 0
    %14 = vsyncpa [#allocation6], 0
    %s15 = scalar_lea.sflag [#allocation6], 1
    %16 = vsyncpa %s15, 0
    %17 = vsyncpa [#allocation9], 0
    %s18 = scalar_lea.sflag [#allocation9], 1
    %19 = vsyncpa %s18, 0
    %20 = vsyncpa [#allocation12], 0
    %21 = vsyncpa [#allocation4], 0
    %s22 = scalar_lea.sflag [#allocation4], 1
    %23 = vsyncpa %s22, 0
    loop: start=0, step=1, limit=6
    $region2: #{mpsage_forward.1} parent=1 // loop_pre_header
      _
    $region3: #{mpsage_forward.1} parent=1 // loop_header
      %s25 = sphi 0, %s29
      %p26 = scmp.ge.s32.totalorder %s25, 6
      %s35 = sphi 0, %s37
      %s38 = sphi 0, %s35
      %s39 = sphi 0, %s38
      %s55 = sphi 0, %s39
      %s61 = sphi 0, %s63
      %s64 = sphi 0, %s61
      %s65 = sphi 0, %s64
      %s81 = sphi 0, %s65
      %s87 = sphi 0, %s89
      %s90 = sphi 0, %s87
      %s91 = sphi 0, %s90
      %s107 = sphi 0, %s91
      %s113 = sphi 0, %s115
      %s116 = sphi 0, %s113
      %s117 = sphi 0, %s116
      %s133 = sphi 0, %s117
      %s137 = sphi 0, %s137
      %s139 = sphi 0, %s137
      %s140 = sphi 0, %s139
      %s154 = sphi 0, %s140
      %s158 = sphi 0, %s158
      %s160 = sphi 0, %s158
      %s161 = sphi 0, %s160
      %s175 = sphi 0, %s161
      %s181 = sphi 0, %s183
      %s184 = sphi 0, %s181
      %s185 = sphi 0, %s184
      %s201 = sphi 0, %s185
    $region4: #{mpsage_forward.1} parent=1 // loop_header_branch
      %28 = sbr.rel (%p26) target = $region8
    $region5: #{mpsage_forward.1} parent=1 // loop_body
      %s30 = ssub.s32 %s25, 1
      %s31 = ssub.s32 %s25, 2
      %s32 = sadd.s32 %s25, 1
      %s33 = ssub.s32 %s25, %s32
      %p34 = scmp.eq.s32.totalorder %s33, 0
      %s36 = sadd.s32 %s35, 1
      %s37 = scalar_select %p34, %s35, %s36
      %p40 = pneg %p34
      %p41 = scmp.eq.s32.totalorder %s25, 3
      %p42 = por %p40, %p41
      %p43 = scmp.ne.s32.totalorder %s35, %s38
      %p44 = scmp.eq.s32.totalorder %s25, 0
      %p45 = por %p43, %p44
      %p46 = scmp.ne.s32.totalorder %s35, %s38
      %p47 = scmp.eq.s32.totalorder %s30, 3
      %p48 = por %p46, %p47
      %p49 = scmp.ne.s32.totalorder %s38, %s39
      %p50 = scmp.eq.s32.totalorder %s30, 0
      %p51 = por %p49, %p50
      %p52 = scmp.ne.s32.totalorder %s38, %s39
      %p53 = scmp.eq.s32.totalorder %s31, 3
      %p54 = por %p52, %p53
      %p56 = scmp.ne.s32.totalorder %s39, %s55
      %p57 = scmp.eq.s32.totalorder %s31, 0
      %p58 = por %p56, %p57
      %s59 = ssub.s32 %s25, %s32
      %p60 = scmp.eq.s32.totalorder %s59, 0
      %s62 = sadd.s32 %s61, 1
      %s63 = scalar_select %p60, %s61, %s62
      %p66 = pneg %p60
      %p67 = scmp.eq.s32.totalorder %s25, 3
      %p68 = por %p66, %p67
      %p69 = scmp.ne.s32.totalorder %s61, %s64
      %p70 = scmp.eq.s32.totalorder %s25, 0
      %p71 = por %p69, %p70
      %p72 = scmp.ne.s32.totalorder %s61, %s64
      %p73 = scmp.eq.s32.totalorder %s30, 3
      %p74 = por %p72, %p73
      %p75 = scmp.ne.s32.totalorder %s64, %s65
      %p76 = scmp.eq.s32.totalorder %s30, 0
      %p77 = por %p75, %p76
      %p78 = scmp.ne.s32.totalorder %s64, %s65
      %p79 = scmp.eq.s32.totalorder %s31, 3
      %p80 = por %p78, %p79
      %p82 = scmp.ne.s32.totalorder %s65, %s81
      %p83 = scmp.eq.s32.totalorder %s31, 0
      %p84 = por %p82, %p83
      %s85 = ssub.s32 %s25, %s32
      %p86 = scmp.eq.s32.totalorder %s85, 0
      %s88 = sadd.s32 %s87, 1
      %s89 = scalar_select %p86, %s87, %s88
      %p92 = pneg %p86
      %p93 = scmp.eq.s32.totalorder %s25, 3
      %p94 = por %p92, %p93
      %p95 = scmp.ne.s32.totalorder %s87, %s90
      %p96 = scmp.eq.s32.totalorder %s25, 0
      %p97 = por %p95, %p96
      %p98 = scmp.ne.s32.totalorder %s87, %s90
      %p99 = scmp.eq.s32.totalorder %s30, 3
      %p100 = por %p98, %p99
      %p101 = scmp.ne.s32.totalorder %s90, %s91
      %p102 = scmp.eq.s32.totalorder %s30, 0
      %p103 = por %p101, %p102
      %p104 = scmp.ne.s32.totalorder %s90, %s91
      %p105 = scmp.eq.s32.totalorder %s31, 3
      %p106 = por %p104, %p105
      %p108 = scmp.ne.s32.totalorder %s91, %s107
      %p109 = scmp.eq.s32.totalorder %s31, 0
      %p110 = por %p108, %p109
      %s111 = ssub.s32 %s25, %s32
      %p112 = scmp.eq.s32.totalorder %s111, 0
      %s114 = sadd.s32 %s113, 1
      %s115 = scalar_select %p112, %s113, %s114
      %p118 = pneg %p112
      %p119 = scmp.eq.s32.totalorder %s25, 3
      %p120 = por %p118, %p119
      %p121 = scmp.ne.s32.totalorder %s113, %s116
      %p122 = scmp.eq.s32.totalorder %s25, 0
      %p123 = por %p121, %p122
      %p124 = scmp.ne.s32.totalorder %s113, %s116
      %p125 = scmp.eq.s32.totalorder %s30, 3
      %p126 = por %p124, %p125
      %p127 = scmp.ne.s32.totalorder %s116, %s117
      %p128 = scmp.eq.s32.totalorder %s30, 0
      %p129 = por %p127, %p128
      %p130 = scmp.ne.s32.totalorder %s116, %s117
      %p131 = scmp.eq.s32.totalorder %s31, 3
      %p132 = por %p130, %p131
      %p134 = scmp.ne.s32.totalorder %s117, %s133
      %p135 = scmp.eq.s32.totalorder %s31, 0
      %p136 = por %p134, %p135
      %s138 = sadd.s32 %s137, 1
      %p141 = scmp.eq.s32.totalorder %s25, 3
      %p142 = scmp.ne.s32.totalorder %s137, %s139
      %p143 = scmp.eq.s32.totalorder %s25, 0
      %p144 = por %p142, %p143
      %p145 = scmp.ne.s32.totalorder %s137, %s139
      %p146 = scmp.eq.s32.totalorder %s30, 3
      %p147 = por %p145, %p146
      %p148 = scmp.ne.s32.totalorder %s139, %s140
      %p149 = scmp.eq.s32.totalorder %s30, 0
      %p150 = por %p148, %p149
      %p151 = scmp.ne.s32.totalorder %s139, %s140
      %p152 = scmp.eq.s32.totalorder %s31, 3
      %p153 = por %p151, %p152
      %p155 = scmp.ne.s32.totalorder %s140, %s154
      %p156 = scmp.eq.s32.totalorder %s31, 0
      %p157 = por %p155, %p156
      %s159 = sadd.s32 %s158, 1
      %p162 = scmp.eq.s32.totalorder %s25, 3
      %p163 = scmp.ne.s32.totalorder %s158, %s160
      %p164 = scmp.eq.s32.totalorder %s25, 0
      %p165 = por %p163, %p164
      %p166 = scmp.ne.s32.totalorder %s158, %s160
      %p167 = scmp.eq.s32.totalorder %s30, 3
      %p168 = por %p166, %p167
      %p169 = scmp.ne.s32.totalorder %s160, %s161
      %p170 = scmp.eq.s32.totalorder %s30, 0
      %p171 = por %p169, %p170
      %p172 = scmp.ne.s32.totalorder %s160, %s161
      %p173 = scmp.eq.s32.totalorder %s31, 3
      %p174 = por %p172, %p173
      %p176 = scmp.ne.s32.totalorder %s161, %s175
      %p177 = scmp.eq.s32.totalorder %s31, 0
      %p178 = por %p176, %p177
      %s179 = ssub.s32 %s25, %s32
      %p180 = scmp.eq.s32.totalorder %s179, 0
      %s182 = sadd.s32 %s181, 1
      %s183 = scalar_select %p180, %s181, %s182
      %p186 = pneg %p180
      %p187 = scmp.eq.s32.totalorder %s25, 3
      %p188 = por %p186, %p187
      %p189 = scmp.ne.s32.totalorder %s181, %s184
      %p190 = scmp.eq.s32.totalorder %s25, 0
      %p191 = por %p189, %p190
      %p192 = scmp.ne.s32.totalorder %s181, %s184
      %p193 = scmp.eq.s32.totalorder %s30, 3
      %p194 = por %p192, %p193
      %p195 = scmp.ne.s32.totalorder %s184, %s185
      %p196 = scmp.eq.s32.totalorder %s30, 0
      %p197 = por %p195, %p196
      %p198 = scmp.ne.s32.totalorder %s184, %s185
      %p199 = scmp.eq.s32.totalorder %s31, 3
      %p200 = por %p198, %p199
      %p202 = scmp.ne.s32.totalorder %s185, %s201
      %p203 = scmp.eq.s32.totalorder %s31, 0
      %p204 = por %p202, %p203
      %p205 = scmp.le.s32.totalorder 1, %s25
      %p206 = scmp.lt.s32.totalorder %s25, 5
      %p207 = pnand %p205, %p206
      %p208 = pneg %p207
      // Predicated region
      $region9: #{mpsage_forward.1} parent=5 // pred_check
        _
      $region10: #{mpsage_forward.1} parent=5 // pred_check_branch
        %210 = sbr.rel (%p207) target = $region12
      $region11: #{mpsage_forward.1} parent=5 // pred_region
        %s211 = ssub.s32 %s25, 1
        // Predicated region
        $region13: #{mpsage_forward.1} parent=11 // pred_check
          %p212 = pneg %p150
        $region14: #{mpsage_forward.1} parent=11 // pred_check_branch
          %214 = sbr.rel (%p212) target = $region16
        $region15: #{mpsage_forward.1} parent=11 // pred_region
          %s216 = ssub.s32 2048, 2048
          %217 = vsyncadd [#allocation9], %s216
          %s218 = sshll.u32 [#allocation10], 4
          %s219 = int_to_ptr.vmem [resolvable:$true] %s218
          %224 = dma.hbm_to_vmem [thread:$0]  %s4, 2048, %s219, [#allocation9], 128, 128, 8
        $region16: #{mpsage_forward.1} parent=11 // pred_fallthru
          _
        // Predicated region
        $region17: #{mpsage_forward.1} parent=11 // pred_check
          %p225 = pneg %p171
        $region18: #{mpsage_forward.1} parent=11 // pred_check_branch
          %227 = sbr.rel (%p225) target = $region20
        $region19: #{mpsage_forward.1} parent=11 // pred_region
          %s229 = ssub.s32 64, 64
          %230 = vsyncadd [#allocation12], %s229
          %s232 = sshll.u32 [#allocation11], 4
          %s233 = int_to_ptr.vmem [resolvable:$true] %s232
          %235 = dma.hbm_to_vmem [thread:$0]  %s5, 64, %s233, [#allocation12]
        $region20: #{mpsage_forward.1} parent=11 // pred_fallthru
          _
      $region12: #{mpsage_forward.1} parent=5 // pred_fallthru
        _
      %p236 = scmp.lt.s32.totalorder %s25, 4
      // Predicated region
      $region21: #{mpsage_forward.1} parent=5 // pred_check
        %p237 = pneg %p236
      $region22: #{mpsage_forward.1} parent=5 // pred_check_branch
        %239 = sbr.rel (%p237) target = $region24
      $region23: #{mpsage_forward.1} parent=5 // pred_region
        // Predicated region
        $region25: #{mpsage_forward.1} parent=23 // pred_check
          %p240 = pneg %p45
        $region26: #{mpsage_forward.1} parent=23 // pred_check_branch
          %242 = sbr.rel (%p240) target = $region28
        $region27: #{mpsage_forward.1} parent=23 // pred_region
          %s243 = sand.u32 %s35, 1
          %s244 = scalar_lea.sflag [#allocation3], %s243
          %s245 = sand.u32 %s35, 1
          %s246 = smul.addr %s245, 16
          %s247 = scalar_lea.vmem [#allocation2], %s246
          %s249 = ssub.s32 256, 256
          %250 = vsyncadd %s244, %s249
          %s251 = smul.addr %s25, 4
          %s252 = smul.addr %s251, 64
          %s253 = scalar_lea.hbm %s0, %s252
          %s254 = sshll.u32 %s247, 4
          %s255 = int_to_ptr.vmem [resolvable:$true] %s254
          %260 = dma.hbm_to_vmem [thread:$0]  %s253, 256, %s255, %s244, 64, 64, 4
        $region28: #{mpsage_forward.1} parent=23 // pred_fallthru
          _
        // Predicated region
        $region29: #{mpsage_forward.1} parent=23 // pred_check
          %p261 = pneg %p71
        $region30: #{mpsage_forward.1} parent=23 // pred_check_branch
          %263 = sbr.rel (%p261) target = $region32
        $region31: #{mpsage_forward.1} parent=23 // pred_region
          %s264 = sand.u32 %s25, 1
          %s265 = scalar_lea.sflag [#allocation6], %s264
          %s266 = sand.u32 %s61, 1
          %s267 = smul.addr %s266, 8
          %s268 = scalar_lea.vmem [#allocation5], %s267
          %s270 = ssub.s32 128, 128
          %271 = vsyncadd %s265, %s270
          %s272 = smul.addr %s25, 2
          %s273 = smul.addr %s272, 64
          %s274 = scalar_lea.hbm %s1, %s273
          %s275 = sshll.u32 %s268, 4
          %s276 = int_to_ptr.vmem [resolvable:$true] %s275
          %281 = dma.hbm_to_vmem [thread:$0]  %s274, 128, %s276, %s265, 64, 64, 4
        $region32: #{mpsage_forward.1} parent=23 // pred_fallthru
          _
        // Predicated region
        $region33: #{mpsage_forward.1} parent=23 // pred_check
          %p282 = pneg %p97
        $region34: #{mpsage_forward.1} parent=23 // pred_check_branch
          %284 = sbr.rel (%p282) target = $region36
        $region35: #{mpsage_forward.1} parent=23 // pred_region
          %s285 = sand.u32 %s25, 1
          %s286 = scalar_lea.sflag [#allocation6], %s285
          %s287 = sand.u32 %s87, 1
          %s288 = smul.addr %s287, 4
          %s289 = scalar_lea.vmem [#allocation7], %s288
          %s291 = ssub.s32 64, 64
          %292 = vsyncadd %s286, %s291
          %s293 = smul.addr %s25, 64
          %s294 = scalar_lea.hbm %s2, %s293
          %s296 = sshll.u32 %s289, 4
          %s297 = int_to_ptr.vmem [resolvable:$true] %s296
          %299 = dma.hbm_to_vmem [thread:$0]  %s294, 64, %s297, %s286
        $region36: #{mpsage_forward.1} parent=23 // pred_fallthru
          _
        // Predicated region
        $region37: #{mpsage_forward.1} parent=23 // pred_check
          %p300 = pneg %p123
        $region38: #{mpsage_forward.1} parent=23 // pred_check_branch
          %302 = sbr.rel (%p300) target = $region40
        $region39: #{mpsage_forward.1} parent=23 // pred_region
          %s303 = sand.u32 %s25, 1
          %s304 = scalar_lea.sflag [#allocation9], %s303
          %s305 = sand.u32 %s113, 1
          %s306 = smul.addr %s305, 32
          %s307 = scalar_lea.vmem [#allocation8], %s306
          %s309 = ssub.s32 512, 512
          %310 = vsyncadd %s304, %s309
          %s311 = smul.addr %s25, 8
          %s312 = smul.addr %s311, 64
          %s313 = scalar_lea.hbm %s3, %s312
          %s314 = sshll.u32 %s307, 4
          %s315 = int_to_ptr.vmem [resolvable:$true] %s314
          %320 = dma.hbm_to_vmem [thread:$0]  %s313, 512, %s315, %s304, 64, 64, 4
        $region40: #{mpsage_forward.1} parent=23 // pred_fallthru
          _
      $region24: #{mpsage_forward.1} parent=5 // pred_fallthru
        _
      %p321 = scmp.le.s32.totalorder 1, %s25
      %p322 = scmp.lt.s32.totalorder %s25, 5
      %p323 = pnand %p321, %p322
      %p324 = pneg %p323
      // Predicated region
      $region41: #{mpsage_forward.1} parent=5 // pred_check
        _
      $region42: #{mpsage_forward.1} parent=5 // pred_check_branch
        %326 = sbr.rel (%p323) target = $region44
      $region43: #{mpsage_forward.1} parent=5 // pred_region
        %s327 = ssub.s32 %s25, 1
        %s328 = sand.u32 %s38, 1
        %s329 = scalar_lea.sflag [#allocation3], %s328
        %s330 = sand.u32 %s38, 1
        %s331 = smul.addr %s330, 16
        %s332 = scalar_lea.vmem [#allocation2], %s331
        // Predicated region
        $region45: #{mpsage_forward.1} parent=43 // pred_check
          %p333 = pneg %p51
        $region46: #{mpsage_forward.1} parent=43 // pred_check_branch
          %335 = sbr.rel (%p333) target = $region48
        $region47: #{mpsage_forward.1} parent=43 // pred_region
          %336 = dma.done %s329, 256
        $region48: #{mpsage_forward.1} parent=43 // pred_fallthru
          _
        %s337 = sand.u32 %s30, 1
        %s338 = scalar_lea.sflag [#allocation6], %s337
        %s339 = sand.u32 %s64, 1
        %s340 = smul.addr %s339, 8
        %s341 = scalar_lea.vmem [#allocation5], %s340
        // Predicated region
        $region49: #{mpsage_forward.1} parent=43 // pred_check
          %p342 = pneg %p77
        $region50: #{mpsage_forward.1} parent=43 // pred_check_branch
          %344 = sbr.rel (%p342) target = $region52
        $region51: #{mpsage_forward.1} parent=43 // pred_region
          %345 = dma.done %s338, 128
        $region52: #{mpsage_forward.1} parent=43 // pred_fallthru
          _
        %s346 = sand.u32 %s30, 1
        %s347 = scalar_lea.sflag [#allocation6], %s346
        %s348 = sand.u32 %s90, 1
        %s349 = smul.addr %s348, 4
        %s350 = scalar_lea.vmem [#allocation7], %s349
        // Predicated region
        $region53: #{mpsage_forward.1} parent=43 // pred_check
          %p351 = pneg %p103
        $region54: #{mpsage_forward.1} parent=43 // pred_check_branch
          %353 = sbr.rel (%p351) target = $region56
        $region55: #{mpsage_forward.1} parent=43 // pred_region
          %354 = dma.done %s347, 64
        $region56: #{mpsage_forward.1} parent=43 // pred_fallthru
          _
        %s355 = sand.u32 %s30, 1
        %s356 = scalar_lea.sflag [#allocation9], %s355
        %s357 = sand.u32 %s116, 1
        %s358 = smul.addr %s357, 32
        %s359 = scalar_lea.vmem [#allocation8], %s358
        // Predicated region
        $region57: #{mpsage_forward.1} parent=43 // pred_check
          %p360 = pneg %p129
        $region58: #{mpsage_forward.1} parent=43 // pred_check_branch
          %362 = sbr.rel (%p360) target = $region60
        $region59: #{mpsage_forward.1} parent=43 // pred_region
          %363 = dma.done %s356, 512
        $region60: #{mpsage_forward.1} parent=43 // pred_fallthru
          _
        // Predicated region
        $region61: #{mpsage_forward.1} parent=43 // pred_check
          %p364 = pneg %p150
        $region62: #{mpsage_forward.1} parent=43 // pred_check_branch
          %366 = sbr.rel (%p364) target = $region64
        $region63: #{mpsage_forward.1} parent=43 // pred_region
          %367 = dma.done [#allocation9], 2048
        $region64: #{mpsage_forward.1} parent=43 // pred_fallthru
          _
        // Predicated region
        $region65: #{mpsage_forward.1} parent=43 // pred_check
          %p368 = pneg %p171
        $region66: #{mpsage_forward.1} parent=43 // pred_check_branch
          %370 = sbr.rel (%p368) target = $region68
        $region67: #{mpsage_forward.1} parent=43 // pred_region
          %371 = dma.done [#allocation12], 64
        $region68: #{mpsage_forward.1} parent=43 // pred_fallthru
          _
        %s372 = sand.u32 %s38, 1
        %s373 = scalar_lea.sflag [#allocation3], %s372
        %s374 = sand.u32 %s38, 1
        %s375 = smul.addr %s374, 16
        %s376 = scalar_lea.vmem [#allocation2], %s375
        %p377 = pneg %p51
        %p378 = pneg %p48
        %s379 = sand.u32 %s30, 1
        %s380 = scalar_lea.sflag [#allocation6], %s379
        %s381 = sand.u32 %s64, 1
        %s382 = smul.addr %s381, 8
        %s383 = scalar_lea.vmem [#allocation5], %s382
        %p384 = pneg %p77
        %p385 = pneg %p74
        %s386 = sand.u32 %s30, 1
        %s387 = scalar_lea.sflag [#allocation6], %s386
        %s388 = sand.u32 %s90, 1
        %s389 = smul.addr %s388, 4
        %s390 = scalar_lea.vmem [#allocation7], %s389
        %p391 = pneg %p103
        %p392 = pneg %p100
        %s393 = sand.u32 %s30, 1
        %s394 = scalar_lea.sflag [#allocation9], %s393
        %s395 = sand.u32 %s116, 1
        %s396 = smul.addr %s395, 32
        %s397 = scalar_lea.vmem [#allocation8], %s396
        %p398 = pneg %p129
        %p399 = pneg %p126
        %p400 = pneg %p150
        %p401 = pneg %p147
        %p402 = pneg %p171
        %p403 = pneg %p168
        %p404 = pneg %p197
        %p405 = pneg %p194
        %s406 = sand.u32 %s184, 1
        %s407 = scalar_lea.sflag [#allocation4], %s406
        %s408 = sand.u32 %s184, 1
        %s409 = smul.addr %s408, 8
        %s410 = scalar_lea.vmem [#allocation13], %s409
        %v412 = vld [vmem:[%s332] sm:$0xf]
        %v413 = vld [vmem:[%s332 + $0x4] sm:$0xf]
        %v414 = vld [vmem:[%s332 + $0x8] sm:$0xf]
        %v415 = vld [vmem:[%s332 + $0xc] sm:$0xf]
        %v416 = vld [vmem:[%s341] sm:$0xf]
        %v417 = vld [vmem:[%s341 + $0x4] sm:$0xf]
        %v418 = vld [vmem:[%s350] sm:$0xf]
        %v419 = vld [vmem:[%s359] sm:$0xf]
        %v420 = vld [vmem:[%s359 + $0x4] sm:$0xf]
        %v421 = vld [vmem:[%s359 + $0x8] sm:$0xf]
        %v422 = vld [vmem:[%s359 + $0xc] sm:$0xf]
        %v423 = vld [vmem:[%s359 + $0x10] sm:$0xf]
        %v424 = vld [vmem:[%s359 + $0x14] sm:$0xf]
        %v425 = vld [vmem:[%s359 + $0x18] sm:$0xf]
        %v426 = vld [vmem:[%s359 + $0x1c] sm:$0xf]
        %v427 = vld [vmem:[#allocation10] sm:$0xff]
        %v428 = vld [vmem:[#allocation10 + $0x8] sm:$0xff]
        %v429 = vld [vmem:[#allocation10 + $0x10] sm:$0xff]
        %v430 = vld [vmem:[#allocation10 + $0x18] sm:$0xff]
        %v431 = vld [vmem:[#allocation10 + $0x20] sm:$0xff]
        %v432 = vld [vmem:[#allocation10 + $0x28] sm:$0xff]
        %v433 = vld [vmem:[#allocation10 + $0x30] sm:$0xff]
        %v434 = vld [vmem:[#allocation10 + $0x38] sm:$0xff]
        %v435 = vld [vmem:[#allocation10 + $0x40] sm:$0xff]
        %v436 = vld [vmem:[#allocation10 + $0x48] sm:$0xff]
        %v437 = vld [vmem:[#allocation10 + $0x50] sm:$0xff]
        %v438 = vld [vmem:[#allocation10 + $0x58] sm:$0xff]
        %v439 = vld [vmem:[#allocation10 + $0x60] sm:$0xff]
        %v440 = vld [vmem:[#allocation10 + $0x68] sm:$0xff]
        %v441 = vld [vmem:[#allocation10 + $0x70] sm:$0xff]
        %v442 = vld [vmem:[#allocation10 + $0x78] sm:$0xff]
        %v443 = vld [vmem:[#allocation11] sm:$0x1]
        %v444 = vld [vmem:[#allocation11 + $0x1] sm:$0x1]
        %v445 = vld [vmem:[#allocation11 + $0x2] sm:$0x1]
        %v454 = vunpack.c.l.b16 %v419
        %v455 = vunpack.c.l.b16 %v420
        %v456 = vunpack.c.l.b16 %v421
        %v457 = vunpack.c.l.b16 %v422
        %v458 = vunpack.c.l.b16 %v423
        %v459 = vunpack.c.l.b16 %v424
        %v460 = vunpack.c.l.b16 %v425
        %v461 = vunpack.c.l.b16 %v426
        %v462 = vpack.c.b16 %v455, %v454
        %v463 = vpack.c.b16 %v457, %v456
        %v464 = vpack.c.b16 %v459, %v458
        %v465 = vpack.c.b16 %v461, %v460
        %v474 = vunpack.c.l.b16 %v427
        %v475 = vunpack.c.h.b16 %v427
        %v476 = vunpack.c.l.b16 %v428
        %v477 = vunpack.c.h.b16 %v428
        %v478 = vunpack.c.l.b16 %v429
        %v479 = vunpack.c.h.b16 %v429
        %v480 = vunpack.c.l.b16 %v430
        %v481 = vunpack.c.h.b16 %v430
        %v482 = vunpack.c.l.b16 %v431
        %v483 = vunpack.c.h.b16 %v431
        %v484 = vunpack.c.l.b16 %v432
        %v485 = vunpack.c.h.b16 %v432
        %v486 = vunpack.c.l.b16 %v433
        %v487 = vunpack.c.h.b16 %v433
        %v488 = vunpack.c.l.b16 %v434
        %v489 = vunpack.c.h.b16 %v434
        %v490 = vpack.c.b16 %v476, %v474
        %v491 = vpack.c.b16 %v477, %v475
        %v492 = vpack.c.b16 %v480, %v478
        %v493 = vpack.c.b16 %v481, %v479
        %v494 = vpack.c.b16 %v484, %v482
        %v495 = vpack.c.b16 %v485, %v483
        %v496 = vpack.c.b16 %v488, %v486
        %v497 = vpack.c.b16 %v489, %v487
        %vm506 = vcmask 523264
        %v508 = vsel %vm506, %v462, 0
        %v511 = vsel %vm506, %v463, 0
        %v514 = vsel %vm506, %v464, 0
        %v517 = vsel %vm506, %v465, 0
        %519 = vmatprep.subr.bf16.mxu0 %v491
        %520 = vmatpush1.bf16.msra.mxu0 %v490
        %521 = vmatprep.subr.bf16.mxu0 %v493
        %522 = vmatpush1.bf16.msra.mxu0 %v492
        %523 = vmatprep.subr.bf16.mxu0 %v495
        %524 = vmatpush1.bf16.msra.mxu0 %v494
        %525 = vmatprep.subr.bf16.mxu0 %v497
        %526 = vmatpush1.bf16.msra.mxu0 %v496
        %527 = vmatprep.subr.bf16.mxu0 0
        %528 = vmatpush1.bf16.msra.mxu0 0
        %529 = vmatprep.subr.bf16.mxu0 0
        %530 = vmatpush1.bf16.msra.mxu0 0
        %531 = vmatprep.subr.bf16.mxu0 0
        %532 = vmatpush1.bf16.msra.mxu0 0
        %533 = vmatprep.subr.bf16.mxu0 0
        %534 = vmatpush1.bf16.msra.mxu0 0
        %535 = vmatprep.subr.bf16.mxu0 0
        %536 = vmatpush1.bf16.msra.mxu0 0
        %537 = vmatprep.subr.bf16.mxu0 0
        %538 = vmatpush1.bf16.msra.mxu0 0
        %539 = vmatprep.subr.bf16.mxu0 0
        %540 = vmatpush1.bf16.msra.mxu0 0
        %541 = vmatprep.subr.bf16.mxu0 0
        %542 = vmatpush1.bf16.msra.mxu0 0
        %543 = vmatprep.subr.bf16.mxu0 0
        %544 = vmatpush1.bf16.msra.mxu0 0
        %545 = vmatprep.subr.bf16.mxu0 0
        %546 = vmatpush1.bf16.msra.mxu0 0
        %547 = vmatprep.subr.bf16.mxu0 0
        %548 = vmatpush1.bf16.msra.mxu0 0
        %549 = vmatprep.subr.bf16.mxu0 0
        %550 = vmatpush1.bf16.msra.mxu0 0
        %551 = vmatprep.mubr.bf16.mxu0 0
        %552 = vmatmul.mubr.bf16.gmra.mrb[0].mxu0 %v508
        %v553 = vpop.f32.mrb[0].mxu0
        %v554 = vadd.f32 0.0, %v553
        %v555 = vpop.f32.mrb[0].mxu0
        %v556 = vadd.f32 0.0, %v555
        %v557 = vpop.f32.mrb[0].mxu0
        %v558 = vadd.f32 0.0, %v557
        %v559 = vpop.f32.mrb[0].mxu0
        %v560 = vadd.f32 0.0, %v559
        %561 = vmatprep.mubr.bf16.mxu0 0
        %562 = vmatmul.mubr.bf16.gmra.mrb[0].mxu0 %v511
        %v563 = vpop.f32.mrb[0].mxu0
        %v564 = vadd.f32 0.0, %v563
        %v565 = vpop.f32.mrb[0].mxu0
        %v566 = vadd.f32 0.0, %v565
        %v567 = vpop.f32.mrb[0].mxu0
        %v568 = vadd.f32 0.0, %v567
        %v569 = vpop.f32.mrb[0].mxu0
        %v570 = vadd.f32 0.0, %v569
        %571 = vmatprep.mubr.bf16.mxu0 0
        %572 = vmatmul.mubr.bf16.gmra.mrb[0].mxu0 %v514
        %v573 = vpop.f32.mrb[0].mxu0
        %v574 = vadd.f32 0.0, %v573
        %v575 = vpop.f32.mrb[0].mxu0
        %v576 = vpop.f32.mrb[0].mxu0
        %v577 = vadd.f32 0.0, %v576
        %v578 = vpop.f32.mrb[0].mxu0
        %579 = vmatprep.mubr.bf16.mxu0 0
        %580 = vmatmul.mubr.bf16.gmra.mrb[0].mxu0 %v517
        %v581 = vpop.f32.mrb[0].mxu0
        %v582 = vadd.f32 0.0, %v581
        %v583 = vpop.f32.mrb[0].mxu0
        %v584 = vpop.f32.mrb[0].mxu0
        %v585 = vadd.f32 0.0, %v584
        %v586 = vpop.f32.mrb[0].mxu0
        %587 = vdwg.mxu0
        %v588 = vpack.c.bf16 %v558, %v554
        %v589 = vpack.c.bf16 %v568, %v564
        %v590 = vpack.c.bf16 %v577, %v574
        %v591 = vpack.c.bf16 %v585, %v582
        %v596 = vunpack.c.l.b16 %v412
        %v597 = vunpack.c.l.b16 %v413
        %v598 = vunpack.c.l.b16 %v414
        %v599 = vunpack.c.l.b16 %v415
        %v600 = vpack.c.b16 %v597, %v596
        %v601 = vpack.c.b16 %v599, %v598
        %v603 = vsel %vm506, %v600, 0
        %v606 = vsel %vm506, %v601, 0
        %608 = vmatprep.subr.bf16.mxu0 0
        %609 = vmatpush1.bf16.msra.mxu0 %v588
        %610 = vmatprep.subr.bf16.mxu0 0
        %611 = vmatpush1.bf16.msra.mxu0 %v589
        %612 = vmatprep.subr.bf16.mxu0 0
        %613 = vmatpush1.bf16.msra.mxu0 %v590
        %614 = vmatprep.subr.bf16.mxu0 0
        %615 = vmatpush1.bf16.msra.mxu0 %v591
        %616 = vmatprep.subr.bf16.mxu0 0
        %617 = vmatpush1.bf16.msra.mxu0 0
        %618 = vmatprep.subr.bf16.mxu0 0
        %619 = vmatpush1.bf16.msra.mxu0 0
        %620 = vmatprep.subr.bf16.mxu0 0
        %621 = vmatpush1.bf16.msra.mxu0 0
        %622 = vmatprep.subr.bf16.mxu0 0
        %623 = vmatpush1.bf16.msra.mxu0 0
        %624 = vmatprep.subr.bf16.mxu0 0
        %625 = vmatpush1.bf16.msra.mxu0 0
        %626 = vmatprep.subr.bf16.mxu0 0
        %627 = vmatpush1.bf16.msra.mxu0 0
        %628 = vmatprep.subr.bf16.mxu0 0
        %629 = vmatpush1.bf16.msra.mxu0 0
        %630 = vmatprep.subr.bf16.mxu0 0
        %631 = vmatpush1.bf16.msra.mxu0 0
        %632 = vmatprep.subr.bf16.mxu0 0
        %633 = vmatpush1.bf16.msra.mxu0 0
        %634 = vmatprep.subr.bf16.mxu0 0
        %635 = vmatpush1.bf16.msra.mxu0 0
        %636 = vmatprep.subr.bf16.mxu0 0
        %637 = vmatpush1.bf16.msra.mxu0 0
        %638 = vmatprep.subr.bf16.mxu0 0
        %639 = vmatpush1.bf16.msra.mxu0 0
        %640 = vmatprep.mubr.bf16.mxu0 0
        %641 = vmatmul.mubr.bf16.gmra.mrb[0].mxu0 %v603
        %v642 = vpop.f32.mrb[0].mxu0
        %v643 = vadd.f32 %v556, %v642
        %v644 = vpop.f32.mrb[0].mxu0
        %v645 = vpop.f32.mrb[0].mxu0
        %v646 = vadd.f32 %v560, %v645
        %v647 = vpop.f32.mrb[0].mxu0
        %648 = vmatprep.mubr.bf16.mxu0 0
        %649 = vmatmul.mubr.bf16.gmra.mrb[0].mxu0 %v606
        %v650 = vpop.f32.mrb[0].mxu0
        %v651 = vadd.f32 %v566, %v650
        %v652 = vpop.f32.mrb[0].mxu0
        %v653 = vpop.f32.mrb[0].mxu0
        %v654 = vadd.f32 %v570, %v653
        %v655 = vpop.f32.mrb[0].mxu0
        %656 = vdwg.mxu0
        %v657 = vlaneseq
        %v658 = vshrl.u32 %v657, 7
        %v659 = vsub.s32 0, %v658
        %v660 = vrot.slane %v443, %v659
        %v661 = vadd.f32 %v643, %v660
        %v662 = vadd.f32 %v646, %v660
        %v663 = vadd.f32 %v651, %v660
        %v664 = vadd.f32 %v654, %v660
        %v665 = vmax.f32 %v661, 0.0
        %v666 = vmax.f32 %v662, 0.0
        %v667 = vmax.f32 %v663, 0.0
        %v668 = vmax.f32 %v664, 0.0
        %v669 = vpack.c.bf16 %v666, %v665
        %v670 = vpack.c.bf16 %v668, %v667
        %v675 = vunpack.c.l.b16 %v435
        %v676 = vunpack.c.h.b16 %v435
        %v677 = vunpack.c.l.b16 %v436
        %v678 = vunpack.c.h.b16 %v436
        %v679 = vunpack.c.l.b16 %v437
        %v680 = vunpack.c.h.b16 %v437
        %v681 = vunpack.c.l.b16 %v438
        %v682 = vunpack.c.h.b16 %v438
        %v683 = vpack.c.b16 %v677, %v675
        %v684 = vpack.c.b16 %v678, %v676
        %v685 = vpack.c.b16 %v681, %v679
        %v686 = vpack.c.b16 %v682, %v680
        %vm691 = vcmask 261120
        %v693 = vsel %vm691, %v669, 0
        %v696 = vsel %vm691, %v670, 0
        %698 = vmatprep.subr.bf16.mxu0 %v684
        %699 = vmatpush1.bf16.msra.mxu0 %v683
        %700 = vmatprep.subr.bf16.mxu0 %v686
        %701 = vmatpush1.bf16.msra.mxu0 %v685
        %702 = vmatprep.subr.bf16.mxu0 0
        %703 = vmatpush1.bf16.msra.mxu0 0
        %704 = vmatprep.subr.bf16.mxu0 0
        %705 = vmatpush1.bf16.msra.mxu0 0
        %706 = vmatprep.subr.bf16.mxu0 0
        %707 = vmatpush1.bf16.msra.mxu0 0
        %708 = vmatprep.subr.bf16.mxu0 0
        %709 = vmatpush1.bf16.msra.mxu0 0
        %710 = vmatprep.subr.bf16.mxu0 0
        %711 = vmatpush1.bf16.msra.mxu0 0
        %712 = vmatprep.subr.bf16.mxu0 0
        %713 = vmatpush1.bf16.msra.mxu0 0
        %714 = vmatprep.subr.bf16.mxu0 0
        %715 = vmatpush1.bf16.msra.mxu0 0
        %716 = vmatprep.subr.bf16.mxu0 0
        %717 = vmatpush1.bf16.msra.mxu0 0
        %718 = vmatprep.subr.bf16.mxu0 0
        %719 = vmatpush1.bf16.msra.mxu0 0
        %720 = vmatprep.subr.bf16.mxu0 0
        %721 = vmatpush1.bf16.msra.mxu0 0
        %722 = vmatprep.subr.bf16.mxu0 0
        %723 = vmatpush1.bf16.msra.mxu0 0
        %724 = vmatprep.subr.bf16.mxu0 0
        %725 = vmatpush1.bf16.msra.mxu0 0
        %726 = vmatprep.subr.bf16.mxu0 0
        %727 = vmatpush1.bf16.msra.mxu0 0
        %728 = vmatprep.subr.bf16.mxu0 0
        %729 = vmatpush1.bf16.msra.mxu0 0
        %730 = vmatprep.mubr.bf16.mxu0 0
        %731 = vmatmul.mubr.bf16.gmra.mrb[0].mxu0 %v693
        %v732 = vpop.f32.mrb[0].mxu0
        %v733 = vadd.f32 0.0, %v732
        %v734 = vpop.f32.mrb[0].mxu0
        %v735 = vadd.f32 0.0, %v734
        %v736 = vpop.f32.mrb[0].mxu0
        %v737 = vadd.f32 0.0, %v736
        %v738 = vpop.f32.mrb[0].mxu0
        %v739 = vadd.f32 0.0, %v738
        %740 = vmatprep.mubr.bf16.mxu0 0
        %741 = vmatmul.mubr.bf16.gmra.mrb[0].mxu0 %v696
        %v742 = vpop.f32.mrb[0].mxu0
        %v743 = vadd.f32 0.0, %v742
        %v744 = vpop.f32.mrb[0].mxu0
        %v745 = vpop.f32.mrb[0].mxu0
        %v746 = vadd.f32 0.0, %v745
        %v747 = vpop.f32.mrb[0].mxu0
        %748 = vdwg.mxu0
        %v749 = vpack.c.bf16 %v737, %v733
        %v750 = vpack.c.bf16 %v746, %v743
        %v753 = vunpack.c.l.b16 %v416
        %v754 = vunpack.c.l.b16 %v417
        %v755 = vpack.c.b16 %v754, %v753
        %v757 = vsel %vm691, %v755, 0
        %759 = vmatprep.subr.bf16.mxu0 0
        %760 = vmatpush1.bf16.msra.mxu0 %v749
        %761 = vmatprep.subr.bf16.mxu0 0
        %762 = vmatpush1.bf16.msra.mxu0 %v750
        %763 = vmatprep.subr.bf16.mxu0 0
        %764 = vmatpush1.bf16.msra.mxu0 0
        %765 = vmatprep.subr.bf16.mxu0 0
        %766 = vmatpush1.bf16.msra.mxu0 0
        %767 = vmatprep.subr.bf16.mxu0 0
        %768 = vmatpush1.bf16.msra.mxu0 0
        %769 = vmatprep.subr.bf16.mxu0 0
        %770 = vmatpush1.bf16.msra.mxu0 0
        %771 = vmatprep.subr.bf16.mxu0 0
        %772 = vmatpush1.bf16.msra.mxu0 0
        %773 = vmatprep.subr.bf16.mxu0 0
        %774 = vmatpush1.bf16.msra.mxu0 0
        %775 = vmatprep.subr.bf16.mxu0 0
        %776 = vmatpush1.bf16.msra.mxu0 0
        %777 = vmatprep.subr.bf16.mxu0 0
        %778 = vmatpush1.bf16.msra.mxu0 0
        %779 = vmatprep.subr.bf16.mxu0 0
        %780 = vmatpush1.bf16.msra.mxu0 0
        %781 = vmatprep.subr.bf16.mxu0 0
        %782 = vmatpush1.bf16.msra.mxu0 0
        %783 = vmatprep.subr.bf16.mxu0 0
        %784 = vmatpush1.bf16.msra.mxu0 0
        %785 = vmatprep.subr.bf16.mxu0 0
        %786 = vmatpush1.bf16.msra.mxu0 0
        %787 = vmatprep.subr.bf16.mxu0 0
        %788 = vmatpush1.bf16.msra.mxu0 0
        %789 = vmatprep.subr.bf16.mxu0 0
        %790 = vmatpush1.bf16.msra.mxu0 0
        %791 = vmatprep.mubr.bf16.mxu0 0
        %792 = vmatmul.mubr.bf16.gmra.mrb[0].mxu0 %v757
        %v793 = vpop.f32.mrb[0].mxu0
        %v794 = vadd.f32 %v735, %v793
        %v795 = vpop.f32.mrb[0].mxu0
        %v796 = vpop.f32.mrb[0].mxu0
        %v797 = vadd.f32 %v739, %v796
        %v798 = vpop.f32.mrb[0].mxu0
        %799 = vdwg.mxu0
        %v800 = vlaneseq
        %v801 = vshrl.u32 %v800, 7
        %v802 = vsub.s32 0, %v801
        %v803 = vrot.slane %v444, %v802
        %v804 = vadd.f32 %v794, %v803
        %v805 = vadd.f32 %v797, %v803
        %v806 = vmax.f32 %v804, 0.0
        %v807 = vmax.f32 %v805, 0.0
        %v808 = vpack.c.bf16 %v807, %v806
        %v813 = vunpack.c.l.b16 %v439
        %v814 = vunpack.c.h.b16 %v439
        %v815 = vunpack.c.l.b16 %v440
        %v816 = vunpack.c.h.b16 %v440
        %v817 = vunpack.c.l.b16 %v441
        %v818 = vunpack.c.h.b16 %v441
        %v819 = vunpack.c.l.b16 %v442
        %v820 = vunpack.c.h.b16 %v442
        %v821 = vpack.c.b16 %v815, %v813
        %v822 = vpack.c.b16 %v816, %v814
        %v823 = vpack.c.b16 %v819, %v817
        %v824 = vpack.c.b16 %v820, %v818
        %v830 = vsel %vm691, %v808, 0
        %832 = vmatprep.subr.bf16.mxu0 %v822
        %833 = vmatpush1.bf16.msra.mxu0 %v821
        %834 = vmatprep.subr.bf16.mxu0 %v824
        %835 = vmatpush1.bf16.msra.mxu0 %v823
        %836 = vmatprep.subr.bf16.mxu0 0
        %837 = vmatpush1.bf16.msra.mxu0 0
        %838 = vmatprep.subr.bf16.mxu0 0
        %839 = vmatpush1.bf16.msra.mxu0 0
        %840 = vmatprep.subr.bf16.mxu0 0
        %841 = vmatpush1.bf16.msra.mxu0 0
        %842 = vmatprep.subr.bf16.mxu0 0
        %843 = vmatpush1.bf16.msra.mxu0 0
        %844 = vmatprep.subr.bf16.mxu0 0
        %845 = vmatpush1.bf16.msra.mxu0 0
        %846 = vmatprep.subr.bf16.mxu0 0
        %847 = vmatpush1.bf16.msra.mxu0 0
        %848 = vmatprep.subr.bf16.mxu0 0
        %849 = vmatpush1.bf16.msra.mxu0 0
        %850 = vmatprep.subr.bf16.mxu0 0
        %851 = vmatpush1.bf16.msra.mxu0 0
        %852 = vmatprep.subr.bf16.mxu0 0
        %853 = vmatpush1.bf16.msra.mxu0 0
        %854 = vmatprep.subr.bf16.mxu0 0
        %855 = vmatpush1.bf16.msra.mxu0 0
        %856 = vmatprep.subr.bf16.mxu0 0
        %857 = vmatpush1.bf16.msra.mxu0 0
        %858 = vmatprep.subr.bf16.mxu0 0
        %859 = vmatpush1.bf16.msra.mxu0 0
        %860 = vmatprep.subr.bf16.mxu0 0
        %861 = vmatpush1.bf16.msra.mxu0 0
        %862 = vmatprep.subr.bf16.mxu0 0
        %863 = vmatpush1.bf16.msra.mxu0 0
        %864 = vmatprep.mubr.bf16.mxu0 0
        %865 = vmatmul.mubr.bf16.gmra.mrb[0].mxu0 %v830
        %v866 = vpop.f32.mrb[0].mxu0
        %v867 = vadd.f32 0.0, %v866
        %v868 = vpop.f32.mrb[0].mxu0
        %v869 = vadd.f32 0.0, %v868
        %v870 = vpop.f32.mrb[0].mxu0
        %v871 = vadd.f32 0.0, %v870
        %v872 = vpop.f32.mrb[0].mxu0
        %873 = vdwg.mxu0
        %v874 = vpack.c.bf16 %v871, %v867
        %vm875 = vcmask 130048
        %v877 = vsel %vm875, %v418, 0
        %879 = vmatprep.subr.bf16.mxu0 0
        %880 = vmatpush1.bf16.msra.mxu0 %v874
        %881 = vmatprep.subr.bf16.mxu0 0
        %882 = vmatpush1.bf16.msra.mxu0 0
        %883 = vmatprep.subr.bf16.mxu0 0
        %884 = vmatpush1.bf16.msra.mxu0 0
        %885 = vmatprep.subr.bf16.mxu0 0
        %886 = vmatpush1.bf16.msra.mxu0 0
        %887 = vmatprep.subr.bf16.mxu0 0
        %888 = vmatpush1.bf16.msra.mxu0 0
        %889 = vmatprep.subr.bf16.mxu0 0
        %890 = vmatpush1.bf16.msra.mxu0 0
        %891 = vmatprep.subr.bf16.mxu0 0
        %892 = vmatpush1.bf16.msra.mxu0 0
        %893 = vmatprep.subr.bf16.mxu0 0
        %894 = vmatpush1.bf16.msra.mxu0 0
        %895 = vmatprep.subr.bf16.mxu0 0
        %896 = vmatpush1.bf16.msra.mxu0 0
        %897 = vmatprep.subr.bf16.mxu0 0
        %898 = vmatpush1.bf16.msra.mxu0 0
        %899 = vmatprep.subr.bf16.mxu0 0
        %900 = vmatpush1.bf16.msra.mxu0 0
        %901 = vmatprep.subr.bf16.mxu0 0
        %902 = vmatpush1.bf16.msra.mxu0 0
        %903 = vmatprep.subr.bf16.mxu0 0
        %904 = vmatpush1.bf16.msra.mxu0 0
        %905 = vmatprep.subr.bf16.mxu0 0
        %906 = vmatpush1.bf16.msra.mxu0 0
        %907 = vmatprep.subr.bf16.mxu0 0
        %908 = vmatpush1.bf16.msra.mxu0 0
        %909 = vmatprep.subr.bf16.mxu0 0
        %910 = vmatpush1.bf16.msra.mxu0 0
        %911 = vmatprep.mubr.bf16.mxu0 0
        %912 = vmatmul.mubr.bf16.gmra.mrb[0].mxu0 %v877
        %v913 = vpop.f32.mrb[0].mxu0
        %v914 = vadd.f32 %v869, %v913
        %v915 = vpop.f32.mrb[0].mxu0
        %v916 = vpop.f32.mrb[0].mxu0
        %v917 = vpop.f32.mrb[0].mxu0
        %918 = vdwg.mxu0
        %v919 = vlaneseq
        %v920 = vshrl.u32 %v919, 7
        %v921 = vsub.s32 0, %v920
        %v922 = vrot.slane %v445, %v921
        %v923 = vadd.f32 %v914, %v922
        %924 = vst [vmem:[%s410] sm:$0xff] %v923
        %s925 = sand.u32 %s184, 1
        %s926 = scalar_lea.sflag [#allocation4], %s925
        %s927 = sand.u32 %s184, 1
        %s928 = smul.addr %s927, 8
        %s929 = scalar_lea.vmem [#allocation13], %s928
        // Predicated region
        $region69: #{mpsage_forward.1} parent=43 // pred_check
          %p930 = pneg %p194
        $region70: #{mpsage_forward.1} parent=43 // pred_check_branch
          %932 = sbr.rel (%p930) target = $region72
        $region71: #{mpsage_forward.1} parent=43 // pred_region
          %s934 = ssub.s32 128, 128
          %935 = vsyncadd %s926, %s934
          %s936 = smul.addr %s30, 128
          %s937 = scalar_lea.hbm %s6, %s936
          %s939 = sshll.u32 %s929, 4
          %s940 = int_to_ptr.vmem [resolvable:$true] %s939
          %942 = dma.vmem_to_hbm [thread:$0]  %s940, 128, %s937, %s926
        $region72: #{mpsage_forward.1} parent=43 // pred_fallthru
          _
      $region44: #{mpsage_forward.1} parent=5 // pred_fallthru
        _
      %p943 = scmp.le.s32.totalorder 2, %s25
      // Predicated region
      $region73: #{mpsage_forward.1} parent=5 // pred_check
        %p944 = pneg %p943
      $region74: #{mpsage_forward.1} parent=5 // pred_check_branch
        %946 = sbr.rel (%p944) target = $region76
      $region75: #{mpsage_forward.1} parent=5 // pred_region
        %s947 = ssub.s32 %s25, 2
        // Predicated region
        $region77: #{mpsage_forward.1} parent=75 // pred_check
          %p948 = pneg %p200
        $region78: #{mpsage_forward.1} parent=75 // pred_check_branch
          %950 = sbr.rel (%p948) target = $region80
        $region79: #{mpsage_forward.1} parent=75 // pred_region
          %s951 = sand.u32 %s185, 1
          %s952 = scalar_lea.sflag [#allocation4], %s951
          %s953 = sand.u32 %s185, 1
          %s954 = smul.addr %s953, 8
          %s955 = scalar_lea.vmem [#allocation13], %s954
          %956 = dma.done %s952, 128
        $region80: #{mpsage_forward.1} parent=75 // pred_fallthru
          _
      $region76: #{mpsage_forward.1} parent=5 // pred_fallthru
        _
    $region6: #{mpsage_forward.1} parent=1 // loop_footer
      %s29 = sadd.s32 1, %s25
    $region7: #{mpsage_forward.1} parent=1 // loop_footer_branch
      %24 = sbr.rel target = $region3
    $region8: #{mpsage_forward.1} parent=1 // loop_exit
      _
    %957 = vsyncpa [#allocation3], 1
    %s958 = scalar_lea.sflag [#allocation3], 1
    %959 = vsyncpa %s958, 1
    %960 = vsyncpa [#allocation6], 1
    %s961 = scalar_lea.sflag [#allocation6], 1
    %962 = vsyncpa %s961, 1
    %963 = vsyncpa [#allocation9], 1
    %s964 = scalar_lea.sflag [#allocation9], 1
    %965 = vsyncpa %s964, 1
    %966 = vsyncpa [#allocation12], 1
    %967 = vsyncpa [#allocation4], 1
    %s968 = scalar_lea.sflag [#allocation4], 1
    %969 = vsyncpa %s968, 1

</llo_original>
